<compile_context>
chip_gen: v5e
topology: v5e:2x2
jax: 0.10.0
libtpu: 0.0.40
codegen_flags: <defaults>
</compile_context>

<pallas_src>
import jax
import jax.numpy as jnp
from jax import lax
from jax.experimental import pallas as pl
from jax.experimental.pallas import tpu as pltpu

LANE = 128      # lane width (last dim)
SUBLANE = 8     # f32 sublane granularity (second-to-last dim)
NEG_INF = -1e30


def _round_up(x, m):
    return (x + m - 1) // m * m


def _fused_embed_mlp_softmax_kernel(idx_ref, emb_ref, w1_ref, b1_ref, w2_ref,
                                    b2_ref, out_ref):
    # idx: (tn, 1) i32   emb: (Vp, d)   w1: (d, d)   b1: (1, d)
    # w2:  (d, Vp)       b2: (1, Vp)    out: (tn, Vp)
    tn = idx_ref.shape[0]
    v_p = emb_ref.shape[0]

    idx = idx_ref[...]                                                   # (tn, 1)
    # Fused embedding lookup: one-hot row selector fed to the MXU.
    one_hot = (lax.broadcasted_iota(jnp.int32, (tn, v_p), 1) == idx).astype(jnp.float32)
    x = jnp.dot(one_hot, emb_ref[...], preferred_element_type=jnp.float32)  # (tn, d)

    # Linear 1 + ReLU
    h = jnp.dot(x, w1_ref[...], preferred_element_type=jnp.float32) + b1_ref[...]
    h = jnp.maximum(h, 0.0)
    # Linear 2 (padded vocab columns carry -1e30 bias -> exp underflows to 0)
    a = jnp.dot(h, w2_ref[...], preferred_element_type=jnp.float32) + b2_ref[...]

    # Numerically stable softmax along the (padded, lane-dense) vocab axis.
    a_max = jnp.max(a, axis=-1, keepdims=True)
    e = jnp.exp(a - a_max)
    denom = jnp.sum(e, axis=-1, keepdims=True)
    out_ref[...] = (e * pl.reciprocal(denom, approx=False)).astype(out_ref.dtype)


def fused_forward_pallas(idx_flat, padded_params, *, row_block=2048):
    """idx_flat: (N,) int32 token ids -> (N_pad, 128) f32 softmax probs (padded)."""
    emb_p, w1, b1, w2_p, b2_p = padded_params
    n = idx_flat.shape[0]
    d = w1.shape[0]
    v_p = w2_p.shape[1]
    v_emb_p = emb_p.shape[0]

    tn = min(row_block, _round_up(n, SUBLANE))
    n_p = _round_up(n, tn)

    # Only per-call prep: pad token ids to the tiled row count (index 0 = harmless).
    idx_p = jnp.zeros((n_p, 1), jnp.int32).at[:n, 0].set(idx_flat.astype(jnp.int32))

    out = pl.pallas_call(
        _fused_embed_mlp_softmax_kernel,
        out_shape=jax.ShapeDtypeStruct((n_p, v_p), jnp.float32),
        grid_spec=pltpu.PrefetchScalarGridSpec(
            num_scalar_prefetch=0,
            grid=(n_p // tn,),
            in_specs=[
                pl.BlockSpec((tn, 1), lambda i: (i, 0)),        # idx : streamed, 4 B/row
                pl.BlockSpec((v_emb_p, d), lambda i: (0, 0)),   # emb : resident
                pl.BlockSpec((d, d), lambda i: (0, 0)),         # w1  : resident
                pl.BlockSpec((1, d), lambda i: (0, 0)),         # b1  : resident
                pl.BlockSpec((d, v_p), lambda i: (0, 0)),       # w2  : resident
                pl.BlockSpec((1, v_p), lambda i: (0, 0)),       # b2  : resident
            ],
            out_specs=pl.BlockSpec((tn, v_p), lambda i: (i, 0)),
        ),
        compiler_params=pltpu.CompilerParams(
            dimension_semantics=("parallel",),   # independent row tiles -> 2 TCs on v7x
        ),
    )(idx_p, emb_p, w1, b1, w2_p, b2_p)

    return out  # (n_p, v_p), padded rows/columns


def pad_params(params):
    """One-time padding of parameters (hoisted out of the per-call hot path)."""
    emb, w1, b1, w2, b2 = params
    vocab, d = emb.shape
    v_p = _round_up(vocab, LANE)                 # 65 -> 128 lane-dense vocab
    emb_p = jnp.zeros((v_p, d), jnp.float32).at[:vocab, :].set(emb)
    w2_p = jnp.zeros((d, v_p), jnp.float32).at[:, :vocab].set(w2)
    b2_p = jnp.full((1, v_p), NEG_INF, jnp.float32).at[:, :vocab].set(b2)
    return emb_p, w1, b1, w2_p, b2_p


def simple_broken_model_forward(idx, padded_params, *, vocab_size, strip_padding=True):
    """Forward pass of SimpleBrokenModel (targets=None branch): softmax probs.

    strip_padding=False returns the padded (N_pad, 128) probabilities and avoids an
    extra post-kernel slice pass (padded vocab columns are exactly 0).
    """
    b, s = idx.shape
    probs_p = fused_forward_pallas(idx.reshape(-1), padded_params)
    if not strip_padding:
        return probs_p
    n = b * s
    # TODO(synk): targets / F.cross_entropy branch not implemented (module returns
    # only softmax logits when targets=None).
    return probs_p[:n, :vocab_size].reshape(b, s, vocab_size)


def init_params(key, vocab_size, d_model):
    """Deterministic parameter init matching the module's shapes (unpadded)."""
    k0, k1, k2, k3, k4 = jax.random.split(key, 5)
    emb = jax.random.normal(k0, (vocab_size, d_model), jnp.float32)
    lim1 = 1.0 / jnp.sqrt(d_model)
    w1 = jax.random.uniform(k1, (d_model, d_model), jnp.float32, -lim1, lim1)
    b1 = jax.random.uniform(k2, (1, d_model), jnp.float32, -lim1, lim1)
    w2 = jax.random.uniform(k3, (d_model, vocab_size), jnp.float32, -lim1, lim1)
    b2 = jax.random.uniform(k4, (1, vocab_size), jnp.float32, -lim1, lim1)
    return emb, w1, b1, w2, b2


def _reference_forward(idx, params):
    """Pure-JAX reference for correctness checking."""
    emb, w1, b1, w2, b2 = params
    x = jnp.take(emb, idx.reshape(-1), axis=0)
    h = jnp.maximum(x @ w1 + b1, 0.0)
    a = h @ w2 + b2
    return jax.nn.softmax(a, axis=-1).reshape(idx.shape[0], idx.shape[1], w2.shape[1])


if __name__ == "__main__":
    key = jax.random.PRNGKey(0)

    # Small shapes consistent with the module's config:
    vocab_size = 65        # stand-in for len(vocab) of a char-level corpus
    d_model = 32
    batch = 2
    seq = 8                # <= context_window = 3**2 = 9

    kp, ki = jax.random.split(key)
    params = init_params(kp, vocab_size, d_model)
    padded_params = pad_params(params)          # padded once, outside the hot path
    idx = jax.random.randint(ki, (batch, seq), 0, vocab_size, dtype=jnp.int32)

    fwd = jax.jit(simple_broken_model_forward,
                  static_argnames=("vocab_size", "strip_padding"))
    probs = fwd(idx, padded_params, vocab_size=vocab_size)
    jax.block_until_ready(probs)

    assert probs.shape == (batch, seq, vocab_size)
    assert probs.dtype == jnp.float32
    # softmax rows sum to 1
    assert bool(jnp.allclose(jnp.sum(probs, axis=-1), 1.0, atol=1e-5))
    # matches the pure-JAX reference forward pass
    ref = _reference_forward(idx, params)
    assert bool(jnp.allclose(probs, ref, atol=2e-5, rtol=2e-5))

    print("KERNEL_OK")
</pallas_src>

<mosaic_0001>
module attributes {stable_mosaic.version = 11 : i64} {
  func.func @_fused_embed_mlp_softmax_kernel(%arg0: i32, %arg1: memref<16x1xi32, #tpu.memory_space<vmem>>, %arg2: memref<128x32xf32, #tpu.memory_space<vmem>>, %arg3: memref<32x32xf32, #tpu.memory_space<vmem>>, %arg4: memref<1x32xf32, #tpu.memory_space<vmem>>, %arg5: memref<32x128xf32, #tpu.memory_space<vmem>>, %arg6: memref<1x128xf32, #tpu.memory_space<vmem>>, %arg7: memref<16x128xf32, #tpu.memory_space<vmem>>) attributes {dimension_semantics = [#tpu.dimension_semantics<parallel>], iteration_bounds = array<i64: 1>, scalar_prefetch = 0 : i64, scratch_operands = 0 : i64, tpu.core_type = #tpu.core_type<tc>, window_params = [{transform_indices = @transform_0, window_bounds = array<i64: 16, 1>}, {pipeline_mode = #tpu.pipeline_mode<synchronous>, transform_indices = @transform_1, window_bounds = array<i64: 128, 32>}, {pipeline_mode = #tpu.pipeline_mode<synchronous>, transform_indices = @transform_2, window_bounds = array<i64: 32, 32>}, {pipeline_mode = #tpu.pipeline_mode<synchronous>, transform_indices = @transform_3, window_bounds = array<i64: 1, 32>}, {pipeline_mode = #tpu.pipeline_mode<synchronous>, transform_indices = @transform_4, window_bounds = array<i64: 32, 128>}, {pipeline_mode = #tpu.pipeline_mode<synchronous>, transform_indices = @transform_5, window_bounds = array<i64: 1, 128>}, {transform_indices = @transform_6, window_bounds = array<i64: 16, 128>}]} {
    %c0 = arith.constant 0 : index
    %c0_0 = arith.constant 0 : index
    %0 = vector.load %arg1[%c0, %c0_0] : memref<16x1xi32, #tpu.memory_space<vmem>>, vector<16x1xi32>
    %1 = tpu.iota {dimensions = array<i32: 1>} : vector<16x128xi32>
    %2 = vector.broadcast %0 : vector<16x1xi32> to vector<16x128xi32>
    %3 = arith.cmpi eq, %1, %2 : vector<16x128xi32>
    %4 = arith.extui %3 : vector<16x128xi1> to vector<16x128xi32>
    %5 = arith.sitofp %4 : vector<16x128xi32> to vector<16x128xf32>
    %c0_1 = arith.constant 0 : index
    %c0_2 = arith.constant 0 : index
    %6 = vector.load %arg2[%c0_1, %c0_2] : memref<128x32xf32, #tpu.memory_space<vmem>>, vector<128x32xf32>
    %cst = arith.constant dense<0.000000e+00> : vector<16x32xf32>
    %7 = tpu.matmul %5, %6, %cst {dimension_numbers = #tpu.dot_dimension_numbers<[1], [0], [0], [1], [0, 0, 1, 1], [], []>} : vector<16x128xf32>, vector<128x32xf32>, vector<16x32xf32> -> vector<16x32xf32>
    %c0_3 = arith.constant 0 : index
    %c0_4 = arith.constant 0 : index
    %8 = vector.load %arg3[%c0_3, %c0_4] : memref<32x32xf32, #tpu.memory_space<vmem>>, vector<32x32xf32>
    %cst_5 = arith.constant dense<0.000000e+00> : vector<16x32xf32>
    %9 = tpu.matmul %7, %8, %cst_5 {dimension_numbers = #tpu.dot_dimension_numbers<[1], [0], [0], [1], [0, 0, 1, 1], [], []>} : vector<16x32xf32>, vector<32x32xf32>, vector<16x32xf32> -> vector<16x32xf32>
    %c0_6 = arith.constant 0 : index
    %c0_7 = arith.constant 0 : index
    %10 = vector.load %arg4[%c0_6, %c0_7] : memref<1x32xf32, #tpu.memory_space<vmem>>, vector<1x32xf32>
    %11 = vector.broadcast %10 : vector<1x32xf32> to vector<16x32xf32>
    %12 = arith.addf %9, %11 : vector<16x32xf32>
    %cst_8 = arith.constant 0.000000e+00 : f32
    %13 = vector.broadcast %cst_8 : f32 to vector<16x32xf32>
    %14 = arith.maximumf %12, %13 : vector<16x32xf32>
    %c0_9 = arith.constant 0 : index
    %c0_10 = arith.constant 0 : index
    %15 = vector.load %arg5[%c0_9, %c0_10] : memref<32x128xf32, #tpu.memory_space<vmem>>, vector<32x128xf32>
    %cst_11 = arith.constant dense<0.000000e+00> : vector<16x128xf32>
    %16 = tpu.matmul %14, %15, %cst_11 {dimension_numbers = #tpu.dot_dimension_numbers<[1], [0], [0], [1], [0, 0, 1, 1], [], []>} : vector<16x32xf32>, vector<32x128xf32>, vector<16x128xf32> -> vector<16x128xf32>
    %c0_12 = arith.constant 0 : index
    %c0_13 = arith.constant 0 : index
    %17 = vector.load %arg6[%c0_12, %c0_13] : memref<1x128xf32, #tpu.memory_space<vmem>>, vector<1x128xf32>
    %18 = vector.broadcast %17 : vector<1x128xf32> to vector<16x128xf32>
    %19 = arith.addf %16, %18 : vector<16x128xf32>
    %cst_14 = arith.constant dense<0xFF800000> : vector<16xf32>
    %20 = vector.multi_reduction <maximumf>, %19, %cst_14 [1] : vector<16x128xf32> to vector<16xf32>
    %21 = vector.shape_cast %20 : vector<16xf32> to vector<16x1xf32>
    %22 = vector.broadcast %21 : vector<16x1xf32> to vector<16x128xf32>
    %23 = arith.subf %19, %22 : vector<16x128xf32>
    %24 = math.exp %23 : vector<16x128xf32>
    %cst_15 = arith.constant dense<0.000000e+00> : vector<16xf32>
    %25 = vector.multi_reduction <add>, %24, %cst_15 [1] : vector<16x128xf32> to vector<16xf32>
    %26 = vector.shape_cast %25 : vector<16xf32> to vector<16x1xf32>
    %27 = tpu.reciprocal %26 : vector<16x1xf32> -> vector<16x1xf32>
    %28 = vector.broadcast %27 : vector<16x1xf32> to vector<16x128xf32>
    %29 = arith.mulf %24, %28 : vector<16x128xf32>
    %c0_16 = arith.constant 0 : index
    %c0_17 = arith.constant 0 : index
    %30 = vector.load %arg7[%c0_16, %c0_17] : memref<16x128xf32, #tpu.memory_space<vmem>>, vector<16x128xf32>
    tpu.vector_store %arg7[%c0_16, %c0_17], %29 {strides = array<i32>} : memref<16x128xf32, #tpu.memory_space<vmem>>, vector<16x128xf32>,
    return
  }
  func.func @transform_0(%arg0: i32) -> (i32, i32) {
    %c0_i32 = arith.constant 0 : i32
    %c0_i32_0 = arith.constant 0 : i32
    return %arg0, %c0_i32 : i32, i32
  }
  func.func @transform_1(%arg0: i32) -> (i32, i32) {
    %c0_i32 = arith.constant 0 : i32
    %c0_i32_0 = arith.constant 0 : i32
    %c0_i32_1 = arith.constant 0 : i32
    return %c0_i32, %c0_i32_0 : i32, i32
  }
  func.func @transform_2(%arg0: i32) -> (i32, i32) {
    %c0_i32 = arith.constant 0 : i32
    %c0_i32_0 = arith.constant 0 : i32
    %c0_i32_1 = arith.constant 0 : i32
    return %c0_i32, %c0_i32_0 : i32, i32
  }
  func.func @transform_3(%arg0: i32) -> (i32, i32) {
    %c0_i32 = arith.constant 0 : i32
    %c0_i32_0 = arith.constant 0 : i32
    %c0_i32_1 = arith.constant 0 : i32
    return %c0_i32, %c0_i32_0 : i32, i32
  }
  func.func @transform_4(%arg0: i32) -> (i32, i32) {
    %c0_i32 = arith.constant 0 : i32
    %c0_i32_0 = arith.constant 0 : i32
    %c0_i32_1 = arith.constant 0 : i32
    return %c0_i32, %c0_i32_0 : i32, i32
  }
  func.func @transform_5(%arg0: i32) -> (i32, i32) {
    %c0_i32 = arith.constant 0 : i32
    %c0_i32_0 = arith.constant 0 : i32
    %c0_i32_1 = arith.constant 0 : i32
    return %c0_i32, %c0_i32_0 : i32, i32
  }
  func.func @transform_6(%arg0: i32) -> (i32, i32) {
    %c0_i32 = arith.constant 0 : i32
    %c0_i32_0 = arith.constant 0 : i32
    return %arg0, %c0_i32 : i32, i32
  }
}

</mosaic_0001>

<llo_original>
// kernel: simple_broken_model_forward.1
$region0: #{simple_broken_model_forward.1}
  #allocation0 [shape = 'u32[]', space=smem, size = 0x4, offset = 0x4, fixed_abs, tag = 'smem constant byte address 0x4 - core index']
  #allocation1 [shape = 'u32[72,128]{1,0:T(1,128)}', space=vmem, size = 0x9000, scoped, tag = 'internal scratch']
  %s0 = inlined_call_operand.vmem [shape: s32[16,1], index: 0, kind: input, shape index: {}]
  %s1 = inlined_call_operand.vmem [shape: f32[128,32], index: 1, kind: input, shape index: {}]
  %s2 = inlined_call_operand.vmem [shape: f32[32,32], index: 2, kind: input, shape index: {}]
  %s3 = inlined_call_operand.vmem [shape: f32[1,32], index: 3, kind: input, shape index: {}]
  %s4 = inlined_call_operand.vmem [shape: f32[32,128], index: 4, kind: input, shape index: {}]
  %s5 = inlined_call_operand.vmem [shape: f32[1,128], index: 5, kind: input, shape index: {}]
  %s6 = inlined_call_operand.vmem [shape: f32[16,128], index: 6, kind: output, shape index: {}]
  %s7 = sld [smem:[#allocation0]]
  $region34: #{simple_broken_model_forward.1} parent=0
    _
  %s9 = ssub.s32 1, %s7
  %s10 = scalar_select 0, %s9, %s7
  // Predicated region
  $region2: #{simple_broken_model_forward.1} parent=0 // pred_check
    _
  $region3: #{simple_broken_model_forward.1} parent=0 // pred_check_branch
    %12 = sbr.rel (0) target = $region5
  $region4: #{simple_broken_model_forward.1} parent=0 // pred_region
    _
  $region5: #{simple_broken_model_forward.1} parent=0 // pred_fallthru
    _
  // Predicated region
  $region6: #{simple_broken_model_forward.1} parent=0 // pred_check
    _
  $region7: #{simple_broken_model_forward.1} parent=0 // pred_check_branch
    %14 = sbr.rel (0) target = $region9
  $region8: #{simple_broken_model_forward.1} parent=0 // pred_region
    _
  $region9: #{simple_broken_model_forward.1} parent=0 // pred_fallthru
    _
  // Predicated region
  $region10: #{simple_broken_model_forward.1} parent=0 // pred_check
    _
  $region11: #{simple_broken_model_forward.1} parent=0 // pred_check_branch
    %16 = sbr.rel (0) target = $region13
  $region12: #{simple_broken_model_forward.1} parent=0 // pred_region
    _
  $region13: #{simple_broken_model_forward.1} parent=0 // pred_fallthru
    _
  // Predicated region
  $region14: #{simple_broken_model_forward.1} parent=0 // pred_check
    _
  $region15: #{simple_broken_model_forward.1} parent=0 // pred_check_branch
    %18 = sbr.rel (0) target = $region17
  $region16: #{simple_broken_model_forward.1} parent=0 // pred_region
    _
  $region17: #{simple_broken_model_forward.1} parent=0 // pred_fallthru
    _
  // Predicated region
  $region18: #{simple_broken_model_forward.1} parent=0 // pred_check
    _
  $region19: #{simple_broken_model_forward.1} parent=0 // pred_check_branch
    %20 = sbr.rel (0) target = $region21
  $region20: #{simple_broken_model_forward.1} parent=0 // pred_region
    _
  $region21: #{simple_broken_model_forward.1} parent=0 // pred_fallthru
    _
  // Predicated region
  $region22: #{simple_broken_model_forward.1} parent=0 // pred_check
    _
  $region23: #{simple_broken_model_forward.1} parent=0 // pred_check_branch
    %22 = sbr.rel (0) target = $region25
  $region24: #{simple_broken_model_forward.1} parent=0 // pred_region
    _
  $region25: #{simple_broken_model_forward.1} parent=0 // pred_fallthru
    _
  %v23 = vld [vmem:[%s0] sm:$0xff]
  %v24 = vld [vmem:[%s0 + $0x8] sm:$0xff]
  %v25 = vlaneseq
  %v26 = vand.u32 %v25, 127
  %27 = vset.pattern.permute.xlu0 0
  %28 = vperm.xlu0 %27, %v23
  %v29 = vpop.permute.xlu0 %28
  %30 = vset.pattern.permute.xlu0 0
  %31 = vperm.xlu0 %30, %v24
  %v32 = vpop.permute.xlu0 %31
  %vm33 = vcmp.eq.s32.totalorder %v26, %v29
  %vm34 = vcmp.eq.s32.totalorder %v26, %v32
  %v35 = vsel %vm33, 1, 0
  %v36 = vsel %vm34, 1, 0
  %v37 = vcvt.s32.f32 %v35
  %v38 = vcvt.s32.f32 %v36
  %v39 = vld [vmem:[%s1] sm:$0xff]
  %v40 = vld [vmem:[%s1 + $0x8] sm:$0xff]
  %v41 = vld [vmem:[%s1 + $0x10] sm:$0xff]
  %v42 = vld [vmem:[%s1 + $0x18] sm:$0xff]
  %v43 = vld [vmem:[%s1 + $0x20] sm:$0xff]
  %v44 = vld [vmem:[%s1 + $0x28] sm:$0xff]
  %v45 = vld [vmem:[%s1 + $0x30] sm:$0xff]
  %v46 = vld [vmem:[%s1 + $0x38] sm:$0xff]
  %v47 = vld [vmem:[%s1 + $0x40] sm:$0xff]
  %v48 = vld [vmem:[%s1 + $0x48] sm:$0xff]
  %v49 = vld [vmem:[%s1 + $0x50] sm:$0xff]
  %v50 = vld [vmem:[%s1 + $0x58] sm:$0xff]
  %v51 = vld [vmem:[%s1 + $0x60] sm:$0xff]
  %v52 = vld [vmem:[%s1 + $0x68] sm:$0xff]
  %v53 = vld [vmem:[%s1 + $0x70] sm:$0xff]
  %v54 = vld [vmem:[%s1 + $0x78] sm:$0xff]
  %55 = vmatpush.msra.mxu0 %v54
  %56 = vmatpush.msra.mxu0 %v53
  %57 = vmatpush.msra.mxu0 %v52
  %58 = vmatpush.msra.mxu0 %v51
  %59 = vmatpush.msra.mxu0 %v50
  %60 = vmatpush.msra.mxu0 %v49
  %61 = vmatpush.msra.mxu0 %v48
  %62 = vmatpush.msra.mxu0 %v47
  %63 = vmatpush.msra.mxu0 %v46
  %64 = vmatpush.msra.mxu0 %v45
  %65 = vmatpush.msra.mxu0 %v44
  %66 = vmatpush.msra.mxu0 %v43
  %67 = vmatpush.msra.mxu0 %v42
  %68 = vmatpush.msra.mxu0 %v41
  %69 = vmatpush.msra.mxu0 %v40
  %70 = vmatpush.msra.mxu0 %v39
  %71 = vmatmul.f32.gmra.mxu0 %v37
  %v72 = vpop.f32.mrf.mxu0
  %v73 = vadd.f32 0.0, %v72
  %74 = vmatmul.f32.gmra.mxu0 %v38
  %v75 = vpop.f32.mrf.mxu0
  %v76 = vadd.f32 0.0, %v75
  %77 = vdwg.mxu0
  %v78 = vld [vmem:[%s2] sm:$0xff]
  %v79 = vld [vmem:[%s2 + $0x8] sm:$0xff]
  %v80 = vld [vmem:[%s2 + $0x10] sm:$0xff]
  %v81 = vld [vmem:[%s2 + $0x18] sm:$0xff]
  %v82 = vld [vmem:[%s3] sm:$0x1]
  %v84 = vperm.slane %v82, 0
  %vm86 = vcmask 261120
  %v88 = vsel %vm86, %v73, 0
  %v91 = vsel %vm86, %v76, 0
  %93 = vmatpush.msra.mxu0 0.0
  %94 = vmatpush.msra.mxu0 0.0
  %95 = vmatpush.msra.mxu0 0.0
  %96 = vmatpush.msra.mxu0 0.0
  %97 = vmatpush.msra.mxu0 0.0
  %98 = vmatpush.msra.mxu0 0.0
  %99 = vmatpush.msra.mxu0 0.0
  %100 = vmatpush.msra.mxu0 0.0
  %101 = vmatpush.msra.mxu0 0.0
  %102 = vmatpush.msra.mxu0 0.0
  %103 = vmatpush.msra.mxu0 0.0
  %104 = vmatpush.msra.mxu0 0.0
  %105 = vmatpush.msra.mxu0 %v81
  %106 = vmatpush.msra.mxu0 %v80
  %107 = vmatpush.msra.mxu0 %v79
  %108 = vmatpush.msra.mxu0 %v78
  %109 = vmatmul.f32.gmra.mxu0 %v88
  %v110 = vpop.f32.mrf.mxu0
  %v111 = vadd.f32 %v84, %v110
  %112 = vmatmul.f32.gmra.mxu0 %v91
  %v113 = vpop.f32.mrf.mxu0
  %v114 = vadd.f32 %v84, %v113
  %115 = vdwg.mxu0
  %v116 = vmax.f32 %v111, 0.0
  %v117 = vmax.f32 %v114, 0.0
  %v118 = vld [vmem:[%s4] sm:$0xff]
  %v119 = vld [vmem:[%s4 + $0x8] sm:$0xff]
  %v120 = vld [vmem:[%s4 + $0x10] sm:$0xff]
  %v121 = vld [vmem:[%s4 + $0x18] sm:$0xff]
  %v122 = vld [vmem:[%s5] sm:$0x1]
  %v124 = vperm.slane %v122, 0
  %v127 = vsel %vm86, %v116, 0
  %v130 = vsel %vm86, %v117, 0
  %132 = vmatpush.msra.mxu0 0.0
  %133 = vmatpush.msra.mxu0 0.0
  %134 = vmatpush.msra.mxu0 0.0
  %135 = vmatpush.msra.mxu0 0.0
  %136 = vmatpush.msra.mxu0 0.0
  %137 = vmatpush.msra.mxu0 0.0
  %138 = vmatpush.msra.mxu0 0.0
  %139 = vmatpush.msra.mxu0 0.0
  %140 = vmatpush.msra.mxu0 0.0
  %141 = vmatpush.msra.mxu0 0.0
  %142 = vmatpush.msra.mxu0 0.0
  %143 = vmatpush.msra.mxu0 0.0
  %144 = vmatpush.msra.mxu0 %v121
  %145 = vmatpush.msra.mxu0 %v120
  %146 = vmatpush.msra.mxu0 %v119
  %147 = vmatpush.msra.mxu0 %v118
  %148 = vmatmul.f32.gmra.mxu0 %v127
  %v149 = vpop.f32.mrf.mxu0
  %v150 = vadd.f32 %v124, %v149
  %151 = vmatmul.f32.gmra.mxu0 %v130
  %v152 = vpop.f32.mrf.mxu0
  %v153 = vadd.f32 %v124, %v152
  %154 = vdwg.mxu0
  %155 = vmax.xlane.f32.xlu0 %v150
  %v156 = vpop.xlane.xlu0 %155
  %157 = vmax.xlane.f32.xlu0 %v153
  %v158 = vpop.xlane.xlu0 %157
  %v159 = vsub.f32 %v150, %v156
  %v160 = vsub.f32 %v153, %v158
  %v161 = vmul.f32 %v159, 1.442695
  %v162 = vpow.pop %v161
  %v163 = vmul.f32 %v160, 1.442695
  %v164 = vpow.pop %v163
  %165 = vadd.xlane.f32.xlu0 %v162
  %v166 = vpop.xlane.xlu0 %165
  %167 = vadd.xlane.f32.xlu0 %v164
  %v168 = vpop.xlane.xlu0 %167
  %v169 = vrcp.pop %v166
  %v170 = vmul.f32 %v166, %v169
  %v171 = vsub.f32 1.0, %v170
  %v172 = vmul.f32 %v169, %v171
  %v173 = vadd.f32 %v169, %v172
  %vm174 = vweird.f32 %v166
  %vm175 = vweird.f32 %v169
  %vm176 = vmor %vm174, %vm175
  %v177 = vsel %vm176, %v169, %v173
  %v178 = vand.u32 2147483647, %v166
  %vm179 = vcmp.eq.f32.partialorder %v178, 8.507059e+37
  %v180 = vand.u32 %v166, 2147483648
  %v181 = vor.u32 1.1754944e-38, %v180
  %v182 = vsel %vm179, %v181, %v177
  %v183 = vrcp.pop %v168
  %v184 = vmul.f32 %v168, %v183
  %v185 = vsub.f32 1.0, %v184
  %v186 = vmul.f32 %v183, %v185
  %v187 = vadd.f32 %v183, %v186
  %vm188 = vweird.f32 %v168
  %vm189 = vweird.f32 %v183
  %vm190 = vmor %vm188, %vm189
  %v191 = vsel %vm190, %v183, %v187
  %v192 = vand.u32 2147483647, %v168
  %vm193 = vcmp.eq.f32.partialorder %v192, 8.507059e+37
  %v194 = vand.u32 %v168, 2147483648
  %v195 = vor.u32 1.1754944e-38, %v194
  %v196 = vsel %vm193, %v195, %v191
  %v197 = vmul.f32 %v162, %v182
  %v198 = vmul.f32 %v164, %v196
  %199 = vst [vmem:[%s6] sm:$0xff] %v197
  %200 = vst [vmem:[%s6 + $0x8] sm:$0xff] %v198
  // Predicated region
  $region26: #{simple_broken_model_forward.1} parent=0 // pred_check
    _
  $region27: #{simple_broken_model_forward.1} parent=0 // pred_check_branch
    %202 = sbr.rel (0) target = $region29
  $region28: #{simple_broken_model_forward.1} parent=0 // pred_region
    _
  $region29: #{simple_broken_model_forward.1} parent=0 // pred_fallthru
    _
  // Predicated region
  $region30: #{simple_broken_model_forward.1} parent=0 // pred_check
    _
  $region31: #{simple_broken_model_forward.1} parent=0 // pred_check_branch
    %204 = sbr.rel (0) target = $region33
  $region32: #{simple_broken_model_forward.1} parent=0 // pred_region
    _
  $region33: #{simple_broken_model_forward.1} parent=0 // pred_fallthru
    _

</llo_original>
